<compile_context>
chip_gen: v6e
topology: v6e:2x2x1
jax: 0.10.0
libtpu: 0.0.40
codegen_flags: <defaults>
</compile_context>

<pallas_src>
import functools

import jax
import jax.numpy as jnp
from jax.experimental import pallas as pl
from jax.experimental.pallas import tpu as pltpu


def _moe_allreduce_kernel(eps, x_ref, scale_ref, shared_ref, residual_ref,
                          w_ref, hidden_out_ref, residual_out_ref, acc_ref):
    e = pl.program_id(1)

    x = x_ref[...].astype(jnp.float32)        # [tT, H]
    s = scale_ref[e].astype(jnp.float32)      # [tT, 1] -> lane splat over H
    contrib = x * s

    @pl.when(e == 0)
    def _():
        # Fold shared-expert output + residual into the accumulator init:
        # removes a full (tT, H) fp32 zero-fill sweep and the two adds in the
        # finalize tail.
        acc_ref[...] = (contrib
                        + shared_ref[...].astype(jnp.float32)
                        + residual_ref[...].astype(jnp.float32))

    @pl.when(e != 0)
    def _():
        acc_ref[...] += contrib

    @pl.when(e == pl.num_programs(1) - 1)
    def _():
        out_res = acc_ref[...]
        # RMSNorm over the full hidden (lane) dimension.
        var = jnp.mean(out_res * out_res, axis=-1, keepdims=True)
        inv = jax.lax.rsqrt(var + eps)                      # EUP op
        w = w_ref[...].astype(jnp.float32)                  # [1, H]
        hidden_out_ref[...] = (out_res * (inv * w)).astype(hidden_out_ref.dtype)
        residual_out_ref[...] = out_res.astype(residual_out_ref.dtype)


def _vmem_capacity_bytes():
    try:
        return int(pltpu.get_tpu_info().vmem_capacity_bytes)
    except Exception:
        return 64 << 20   # conservative default (v7x per-TensorCore VMEM)


def _pick_token_tile(T_pad, per_row_bytes, vmem_budget):
    """Largest token tile (multiple of 8, divides T_pad) within the VMEM budget."""
    max_rows = max(8, vmem_budget // max(1, per_row_bytes))
    max_rows = min(max_rows, 1024, T_pad)      # >=512 rows already ~85% of HBM roofline
    if T_pad >= 16:
        max_rows = min(max_rows, T_pad // 2)   # >=2 tiles so megacore (v7x) can shard tokens
    max_rows = max(8, (max_rows // 8) * 8)
    for cand in range(max_rows, 7, -8):
        if T_pad % cand == 0:
            return cand
    return 8                                   # T_pad is a multiple of 8, so 8 always divides


def moe_allreduce(active_experts_token_input,   # [E, T, H]
                  expert_scale_factor,          # [E, T]
                  shared_expert_output,         # [T, H]
                  residual,                     # [T, H]
                  norm_weight,                  # [H]
                  eps=1e-6):
    E, T, H = active_experts_token_input.shape
    out_dtype = shared_expert_output.dtype

    # Pad tokens to a multiple of 8 (sublane granularity). Padded rows are
    # zeros; per-row RMSNorm on them is finite and they are sliced off below.
    T_pad = ((T + 7) // 8) * 8
    if T_pad != T:
        p = T_pad - T
        active_experts_token_input = jnp.pad(
            active_experts_token_input, ((0, 0), (0, p), (0, 0)))
        expert_scale_factor = jnp.pad(expert_scale_factor, ((0, 0), (0, p)))
        shared_expert_output = jnp.pad(shared_expert_output, ((0, p), (0, 0)))
        residual = jnp.pad(residual, ((0, p), (0, 0)))

    in_itemsize = jnp.dtype(active_experts_token_input.dtype).itemsize
    io_itemsize = jnp.dtype(shared_expert_output.dtype).itemsize
    out_itemsize = jnp.dtype(out_dtype).itemsize
    scale_itemsize = jnp.dtype(expert_scale_factor.dtype).itemsize
    w_itemsize = jnp.dtype(norm_weight.dtype).itemsize

    vmem_cap = _vmem_capacity_bytes()
    if vmem_cap <= (64 << 20):      # v7x: 64 MiB per TensorCore
        vmem_budget = 40 << 20
        x_bufs = 2
    else:                           # v5e / v6e: 128 MiB
        vmem_budget = 64 << 20
        x_bufs = 3                  # deeper prefetch of the dominant HBM stream

    # Budget the TOTAL resident set per token tile (all pipeline buffers +
    # fp32 accumulator), not just the expert-input block.
    per_row = H * (in_itemsize * x_bufs        # expert-input stream buffers
                   + io_itemsize * 2 * 2       # shared + residual (budget 2-buf)
                   + out_itemsize * 2 * 2      # two outputs, double-buffered
                   + 4)                        # fp32 accumulator scratch
    per_row += E * scale_itemsize * 2          # all-E scale block for the tile
    tT = _pick_token_tile(T_pad, per_row, vmem_budget)
    num_token_tiles = T_pad // tT

    footprint = tT * per_row + 2 * H * w_itemsize
    vmem_limit = int(min(int(vmem_cap * 0.9),
                         max(32 << 20, footprint + (16 << 20))))

    # Scale with tokens on sublanes, singleton lane dim -> cheap lane broadcast.
    scale3d = expert_scale_factor.reshape(E, T_pad, 1)
    w2d = norm_weight.reshape(1, H)

    cost = pl.CostEstimate(
        flops=2 * E * T_pad * H + 7 * T_pad * H,
        transcendentals=T_pad,
        bytes_accessed=(E * T_pad * H * in_itemsize
                        + E * T_pad * scale_itemsize
                        + 2 * T_pad * H * io_itemsize
                        + H * w_itemsize
                        + 2 * T_pad * H * out_itemsize))

    def _build_and_call(use_buffered):
        can_buffer = use_buffered and hasattr(pl, "Buffered")

        def bspec(shape, idx_map, bufs):
            if can_buffer:
                return pl.BlockSpec(shape, idx_map, pipeline_mode=pl.Buffered(bufs))
            return pl.BlockSpec(shape, idx_map)

        in_specs = [
            # One expert slice per step (expert dim squeezed): the dominant stream.
            bspec((None, tT, H), lambda t, e: (e, t, 0), x_bufs),
            # All E scales for the token tile in ONE DMA (block idx independent of e).
            bspec((E, tT, 1), lambda t, e: (0, t, 0), 2),
            # e-invariant operands: single-buffer to halve their VMEM residency.
            bspec((tT, H), lambda t, e: (t, 0), 1),
            bspec((tT, H), lambda t, e: (t, 0), 1),
            bspec((1, H), lambda t, e: (0, 0), 1),
        ]
        out_specs = [
            pl.BlockSpec((tT, H), lambda t, e: (t, 0)),
            pl.BlockSpec((tT, H), lambda t, e: (t, 0)),
        ]
        return pl.pallas_call(
            functools.partial(_moe_allreduce_kernel, float(eps)),
            out_shape=(
                jax.ShapeDtypeStruct((T_pad, H), out_dtype),
                jax.ShapeDtypeStruct((T_pad, H), out_dtype),
            ),
            grid_spec=pltpu.PrefetchScalarGridSpec(
                num_scalar_prefetch=0,
                grid=(num_token_tiles, E),
                in_specs=in_specs,
                out_specs=out_specs,
                scratch_shapes=[pltpu.VMEM((tT, H), jnp.float32)],
            ),
            compiler_params=pltpu.CompilerParams(
                dimension_semantics=("parallel", "arbitrary"),
                vmem_limit_bytes=vmem_limit),
            cost_estimate=cost,
        )(active_experts_token_input, scale3d,
          shared_expert_output, residual, w2d)

    try:
        hidden, out_res = _build_and_call(True)
    except Exception:
        # Fallback if this JAX build rejects pipeline_mode=pl.Buffered(...).
        hidden, out_res = _build_and_call(False)

    if T_pad != T:
        hidden = hidden[:T]
        out_res = out_res[:T]
    return hidden, out_res


def _reference(x, scale, shared, residual, w, eps):
    xr = x.astype(jnp.float32)
    sr = scale.astype(jnp.float32)
    red = jnp.sum(xr * sr[:, :, None], axis=0)
    out_add = red + shared.astype(jnp.float32)
    out_res = out_add + residual.astype(jnp.float32)
    var = jnp.mean(out_res * out_res, axis=-1, keepdims=True)
    hidden = out_res * jax.lax.rsqrt(var + eps) * w.astype(jnp.float32)[None, :]
    return hidden, out_res


def _run_case(key, num_experts, num_tokens, hidden_size, eps=1e-6):
    k1, k2, k3, k4, k5 = jax.random.split(key, 5)
    x = jax.random.normal(k1, (num_experts, num_tokens, hidden_size), jnp.float32)
    scale = jax.nn.softmax(
        jax.random.normal(k2, (num_experts, num_tokens), jnp.float32), axis=0)
    shared = jax.random.normal(k3, (num_tokens, hidden_size), jnp.float32)
    residual = jax.random.normal(k4, (num_tokens, hidden_size), jnp.float32)
    w = 1.0 + 0.1 * jax.random.normal(k5, (hidden_size,), jnp.float32)

    hidden, out_res = moe_allreduce(x, scale, shared, residual, w, eps)
    jax.block_until_ready((hidden, out_res))

    ref_hidden, ref_res = _reference(x, scale, shared, residual, w, eps)
    assert hidden.shape == ref_hidden.shape and out_res.shape == ref_res.shape
    assert jnp.allclose(hidden, ref_hidden, atol=1e-4, rtol=1e-4)
    assert jnp.allclose(out_res, ref_res, atol=1e-4, rtol=1e-4)


if __name__ == "__main__":
    key = jax.random.PRNGKey(0)
    k_a, k_b = jax.random.split(key, 2)

    # Main case: E=4, T=8 (<= max_token 128), H=128.
    _run_case(k_a, num_experts=4, num_tokens=8, hidden_size=128)
    # Ragged-token case: T=12 pads to 16 -> two token tiles (exercises padding
    # and the multi-tile / megacore path).
    _run_case(k_b, num_experts=3, num_tokens=12, hidden_size=128)

    print("KERNEL_OK")
</pallas_src>

<mosaic_0001>
module attributes {stable_mosaic.version = 11 : i64} {
  func.func @_moe_allreduce_kernel(%arg0: i32, %arg1: i32, %arg2: memref<1x8x128xf32, #tpu.memory_space<vmem>>, %arg3: memref<4x8x1xf32, #tpu.memory_space<vmem>>, %arg4: memref<8x128xf32, #tpu.memory_space<vmem>>, %arg5: memref<8x128xf32, #tpu.memory_space<vmem>>, %arg6: memref<1x128xf32, #tpu.memory_space<vmem>>, %arg7: memref<8x128xf32, #tpu.memory_space<vmem>>, %arg8: memref<8x128xf32, #tpu.memory_space<vmem>>, %arg9: memref<8x128xf32, #tpu.memory_space<vmem>>) attributes {dimension_semantics = [#tpu.dimension_semantics<parallel>, #tpu.dimension_semantics<arbitrary>], iteration_bounds = array<i64: 1, 4>, scalar_prefetch = 0 : i64, scratch_operands = 1 : i64, tpu.core_type = #tpu.core_type<tc>, window_params = [{pipeline_mode = #tpu.pipeline_mode<double_buffered>, transform_indices = @transform_0, window_bounds = array<i64: 1, 8, 128>}, {pipeline_mode = #tpu.pipeline_mode<double_buffered>, transform_indices = @transform_1, window_bounds = array<i64: 4, 8, 1>}, {pipeline_mode = #tpu.pipeline_mode<synchronous>, transform_indices = @transform_2, window_bounds = array<i64: 8, 128>}, {pipeline_mode = #tpu.pipeline_mode<synchronous>, transform_indices = @transform_3, window_bounds = array<i64: 8, 128>}, {pipeline_mode = #tpu.pipeline_mode<synchronous>, transform_indices = @transform_4, window_bounds = array<i64: 1, 128>}, {transform_indices = @transform_5, window_bounds = array<i64: 8, 128>}, {transform_indices = @transform_6, window_bounds = array<i64: 8, 128>}]} {
    %c0 = arith.constant 0 : index
    %c0_0 = arith.constant 0 : index
    %c0_1 = arith.constant 0 : index
    %0 = vector.load %arg2[%c0, %c0_0, %c0_1] : memref<1x8x128xf32, #tpu.memory_space<vmem>>, vector<1x8x128xf32>
    %1 = vector.shape_cast %0 : vector<1x8x128xf32> to vector<8x128xf32>
    %2 = arith.index_cast %arg1 : i32 to index
    %c0_2 = arith.constant 0 : index
    %c0_3 = arith.constant 0 : index
    %3 = vector.load %arg3[%2, %c0_2, %c0_3] : memref<4x8x1xf32, #tpu.memory_space<vmem>>, vector<1x8x1xf32>
    %4 = vector.shape_cast %3 : vector<1x8x1xf32> to vector<8x1xf32>
    %5 = vector.broadcast %4 : vector<8x1xf32> to vector<8x128xf32>
    %6 = arith.mulf %1, %5 : vector<8x128xf32>
    %c0_i32 = arith.constant 0 : i32
    %7 = arith.cmpi eq, %arg1, %c0_i32 : i32
    %8 = arith.extui %7 : i1 to i32
    %c0_i32_4 = arith.constant 0 : i32
    %9 = arith.cmpi ne, %8, %c0_i32_4 : i32
    scf.if %9 {
      %c0_8 = arith.constant 0 : index
      %c0_9 = arith.constant 0 : index
      %16 = vector.load %arg4[%c0_8, %c0_9] : memref<8x128xf32, #tpu.memory_space<vmem>>, vector<8x128xf32>
      %17 = arith.addf %6, %16 : vector<8x128xf32>
      %c0_10 = arith.constant 0 : index
      %c0_11 = arith.constant 0 : index
      %18 = vector.load %arg5[%c0_10, %c0_11] : memref<8x128xf32, #tpu.memory_space<vmem>>, vector<8x128xf32>
      %19 = arith.addf %17, %18 : vector<8x128xf32>
      %c0_12 = arith.constant 0 : index
      %c0_13 = arith.constant 0 : index
      %20 = vector.load %arg9[%c0_12, %c0_13] : memref<8x128xf32, #tpu.memory_space<vmem>>, vector<8x128xf32>
      tpu.vector_store %arg9[%c0_12, %c0_13], %19 {strides = array<i32>} : memref<8x128xf32, #tpu.memory_space<vmem>>, vector<8x128xf32>,
    } else {
    }
    %c0_i32_5 = arith.constant 0 : i32
    %10 = arith.cmpi ne, %arg1, %c0_i32_5 : i32
    %11 = arith.extui %10 : i1 to i32
    %c0_i32_6 = arith.constant 0 : i32
    %12 = arith.cmpi ne, %11, %c0_i32_6 : i32
    scf.if %12 {
      %c0_8 = arith.constant 0 : index
      %c0_9 = arith.constant 0 : index
      %16 = vector.load %arg9[%c0_8, %c0_9] : memref<8x128xf32, #tpu.memory_space<vmem>>, vector<8x128xf32>
      %17 = arith.addf %16, %6 : vector<8x128xf32>
      %c0_10 = arith.constant 0 : index
      %c0_11 = arith.constant 0 : index
      %18 = vector.load %arg9[%c0_10, %c0_11] : memref<8x128xf32, #tpu.memory_space<vmem>>, vector<8x128xf32>
      tpu.vector_store %arg9[%c0_10, %c0_11], %17 {strides = array<i32>} : memref<8x128xf32, #tpu.memory_space<vmem>>, vector<8x128xf32>,
    } else {
    }
    %c3_i32 = arith.constant 3 : i32
    %13 = arith.cmpi eq, %arg1, %c3_i32 : i32
    %14 = arith.extui %13 : i1 to i32
    %c0_i32_7 = arith.constant 0 : i32
    %15 = arith.cmpi ne, %14, %c0_i32_7 : i32
    scf.if %15 {
      %c0_8 = arith.constant 0 : index
      %c0_9 = arith.constant 0 : index
      %16 = vector.load %arg9[%c0_8, %c0_9] : memref<8x128xf32, #tpu.memory_space<vmem>>, vector<8x128xf32>
      %17 = arith.mulf %16, %16 : vector<8x128xf32>
      %cst = arith.constant dense<0.000000e+00> : vector<8xf32>
      %18 = vector.multi_reduction <add>, %17, %cst [1] : vector<8x128xf32> to vector<8xf32>
      %19 = vector.shape_cast %18 : vector<8xf32> to vector<8x1xf32>
      %cst_10 = arith.constant 1.280000e+02 : f32
      %20 = vector.broadcast %cst_10 : f32 to vector<8x1xf32>
      %21 = arith.divf %19, %20 : vector<8x1xf32>
      %cst_11 = arith.constant 9.99999997E-7 : f32
      %22 = vector.broadcast %cst_11 : f32 to vector<8x1xf32>
      %23 = arith.addf %21, %22 : vector<8x1xf32>
      %24 = math.rsqrt %23 : vector<8x1xf32>
      %c0_12 = arith.constant 0 : index
      %c0_13 = arith.constant 0 : index
      %25 = vector.load %arg6[%c0_12, %c0_13] : memref<1x128xf32, #tpu.memory_space<vmem>>, vector<1x128xf32>
      %26 = vector.broadcast %24 : vector<8x1xf32> to vector<8x128xf32>
      %27 = vector.broadcast %25 : vector<1x128xf32> to vector<8x128xf32>
      %28 = arith.mulf %26, %27 : vector<8x128xf32>
      %29 = arith.mulf %16, %28 : vector<8x128xf32>
      %c0_14 = arith.constant 0 : index
      %c0_15 = arith.constant 0 : index
      %30 = vector.load %arg7[%c0_14, %c0_15] : memref<8x128xf32, #tpu.memory_space<vmem>>, vector<8x128xf32>
      tpu.vector_store %arg7[%c0_14, %c0_15], %29 {strides = array<i32>} : memref<8x128xf32, #tpu.memory_space<vmem>>, vector<8x128xf32>,
      %c0_16 = arith.constant 0 : index
      %c0_17 = arith.constant 0 : index
      %31 = vector.load %arg8[%c0_16, %c0_17] : memref<8x128xf32, #tpu.memory_space<vmem>>, vector<8x128xf32>
      tpu.vector_store %arg8[%c0_16, %c0_17], %16 {strides = array<i32>} : memref<8x128xf32, #tpu.memory_space<vmem>>, vector<8x128xf32>,
    } else {
    }
    return
  }
  func.func @transform_0(%arg0: i32, %arg1: i32) -> (i32, i32, i32) {
    %c0_i32 = arith.constant 0 : i32
    %c0_i32_0 = arith.constant 0 : i32
    return %arg1, %arg0, %c0_i32 : i32, i32, i32
  }
  func.func @transform_1(%arg0: i32, %arg1: i32) -> (i32, i32, i32) {
    %c0_i32 = arith.constant 0 : i32
    %c0_i32_0 = arith.constant 0 : i32
    %c0_i32_1 = arith.constant 0 : i32
    return %c0_i32, %arg0, %c0_i32_0 : i32, i32, i32
  }
  func.func @transform_2(%arg0: i32, %arg1: i32) -> (i32, i32) {
    %c0_i32 = arith.constant 0 : i32
    %c0_i32_0 = arith.constant 0 : i32
    return %arg0, %c0_i32 : i32, i32
  }
  func.func @transform_3(%arg0: i32, %arg1: i32) -> (i32, i32) {
    %c0_i32 = arith.constant 0 : i32
    %c0_i32_0 = arith.constant 0 : i32
    return %arg0, %c0_i32 : i32, i32
  }
  func.func @transform_4(%arg0: i32, %arg1: i32) -> (i32, i32) {
    %c0_i32 = arith.constant 0 : i32
    %c0_i32_0 = arith.constant 0 : i32
    %c0_i32_1 = arith.constant 0 : i32
    return %c0_i32, %c0_i32_0 : i32, i32
  }
  func.func @transform_5(%arg0: i32, %arg1: i32) -> (i32, i32) {
    %c0_i32 = arith.constant 0 : i32
    %c0_i32_0 = arith.constant 0 : i32
    return %arg0, %c0_i32 : i32, i32
  }
  func.func @transform_6(%arg0: i32, %arg1: i32) -> (i32, i32) {
    %c0_i32 = arith.constant 0 : i32
    %c0_i32_0 = arith.constant 0 : i32
    return %arg0, %c0_i32 : i32, i32
  }
}

module attributes {stable_mosaic.version = 11 : i64} {
  func.func @_moe_allreduce_kernel(%arg0: i32, %arg1: i32, %arg2: memref<1x8x128xf32, #tpu.memory_space<vmem>>, %arg3: memref<4x8x1xf32, #tpu.memory_space<vmem>>, %arg4: memref<8x128xf32, #tpu.memory_space<vmem>>, %arg5: memref<8x128xf32, #tpu.memory_space<vmem>>, %arg6: memref<1x128xf32, #tpu.memory_space<vmem>>, %arg7: memref<8x128xf32, #tpu.memory_space<vmem>>, %arg8: memref<8x128xf32, #tpu.memory_space<vmem>>, %arg9: memref<8x128xf32, #tpu.memory_space<vmem>>) attributes {dimension_semantics = [#tpu.dimension_semantics<parallel>, #tpu.dimension_semantics<arbitrary>], iteration_bounds = array<i64: 1, 4>, scalar_prefetch = 0 : i64, scratch_operands = 1 : i64, tpu.core_type = #tpu.core_type<tc>, window_params = [{transform_indices = @transform_0, window_bounds = array<i64: 1, 8, 128>}, {transform_indices = @transform_1, window_bounds = array<i64: 4, 8, 1>}, {transform_indices = @transform_2, window_bounds = array<i64: 8, 128>}, {transform_indices = @transform_3, window_bounds = array<i64: 8, 128>}, {pipeline_mode = #tpu.pipeline_mode<synchronous>, transform_indices = @transform_4, window_bounds = array<i64: 1, 128>}, {transform_indices = @transform_5, window_bounds = array<i64: 8, 128>}, {transform_indices = @transform_6, window_bounds = array<i64: 8, 128>}]} {
    %c0 = arith.constant 0 : index
    %c0_0 = arith.constant 0 : index
    %c0_1 = arith.constant 0 : index
    %0 = vector.load %arg2[%c0, %c0_0, %c0_1] : memref<1x8x128xf32, #tpu.memory_space<vmem>>, vector<1x8x128xf32>
    %1 = vector.shape_cast %0 : vector<1x8x128xf32> to vector<8x128xf32>
    %2 = arith.index_cast %arg1 : i32 to index
    %c0_2 = arith.constant 0 : index
    %c0_3 = arith.constant 0 : index
    %3 = vector.load %arg3[%2, %c0_2, %c0_3] : memref<4x8x1xf32, #tpu.memory_space<vmem>>, vector<1x8x1xf32>
    %4 = vector.shape_cast %3 : vector<1x8x1xf32> to vector<8x1xf32>
    %5 = vector.broadcast %4 : vector<8x1xf32> to vector<8x128xf32>
    %6 = arith.mulf %1, %5 : vector<8x128xf32>
    %c0_i32 = arith.constant 0 : i32
    %7 = arith.cmpi eq, %arg1, %c0_i32 : i32
    %8 = arith.extui %7 : i1 to i32
    %c0_i32_4 = arith.constant 0 : i32
    %9 = arith.cmpi ne, %8, %c0_i32_4 : i32
    scf.if %9 {
      %c0_8 = arith.constant 0 : index
      %c0_9 = arith.constant 0 : index
      %16 = vector.load %arg4[%c0_8, %c0_9] : memref<8x128xf32, #tpu.memory_space<vmem>>, vector<8x128xf32>
      %17 = arith.addf %6, %16 : vector<8x128xf32>
      %c0_10 = arith.constant 0 : index
      %c0_11 = arith.constant 0 : index
      %18 = vector.load %arg5[%c0_10, %c0_11] : memref<8x128xf32, #tpu.memory_space<vmem>>, vector<8x128xf32>
      %19 = arith.addf %17, %18 : vector<8x128xf32>
      %c0_12 = arith.constant 0 : index
      %c0_13 = arith.constant 0 : index
      %20 = vector.load %arg9[%c0_12, %c0_13] : memref<8x128xf32, #tpu.memory_space<vmem>>, vector<8x128xf32>
      tpu.vector_store %arg9[%c0_12, %c0_13], %19 {strides = array<i32>} : memref<8x128xf32, #tpu.memory_space<vmem>>, vector<8x128xf32>,
    } else {
    }
    %c0_i32_5 = arith.constant 0 : i32
    %10 = arith.cmpi ne, %arg1, %c0_i32_5 : i32
    %11 = arith.extui %10 : i1 to i32
    %c0_i32_6 = arith.constant 0 : i32
    %12 = arith.cmpi ne, %11, %c0_i32_6 : i32
    scf.if %12 {
      %c0_8 = arith.constant 0 : index
      %c0_9 = arith.constant 0 : index
      %16 = vector.load %arg9[%c0_8, %c0_9] : memref<8x128xf32, #tpu.memory_space<vmem>>, vector<8x128xf32>
      %17 = arith.addf %16, %6 : vector<8x128xf32>
      %c0_10 = arith.constant 0 : index
      %c0_11 = arith.constant 0 : index
      %18 = vector.load %arg9[%c0_10, %c0_11] : memref<8x128xf32, #tpu.memory_space<vmem>>, vector<8x128xf32>
      tpu.vector_store %arg9[%c0_10, %c0_11], %17 {strides = array<i32>} : memref<8x128xf32, #tpu.memory_space<vmem>>, vector<8x128xf32>,
    } else {
    }
    %c3_i32 = arith.constant 3 : i32
    %13 = arith.cmpi eq, %arg1, %c3_i32 : i32
    %14 = arith.extui %13 : i1 to i32
    %c0_i32_7 = arith.constant 0 : i32
    %15 = arith.cmpi ne, %14, %c0_i32_7 : i32
    scf.if %15 {
      %c0_8 = arith.constant 0 : index
      %c0_9 = arith.constant 0 : index
      %16 = vector.load %arg9[%c0_8, %c0_9] : memref<8x128xf32, #tpu.memory_space<vmem>>, vector<8x128xf32>
      %17 = arith.mulf %16, %16 : vector<8x128xf32>
      %cst = arith.constant dense<0.000000e+00> : vector<8xf32>
      %18 = vector.multi_reduction <add>, %17, %cst [1] : vector<8x128xf32> to vector<8xf32>
      %19 = vector.shape_cast %18 : vector<8xf32> to vector<8x1xf32>
      %cst_10 = arith.constant 1.280000e+02 : f32
      %20 = vector.broadcast %cst_10 : f32 to vector<8x1xf32>
      %21 = arith.divf %19, %20 : vector<8x1xf32>
      %cst_11 = arith.constant 9.99999997E-7 : f32
      %22 = vector.broadcast %cst_11 : f32 to vector<8x1xf32>
      %23 = arith.addf %21, %22 : vector<8x1xf32>
      %24 = math.rsqrt %23 : vector<8x1xf32>
      %c0_12 = arith.constant 0 : index
      %c0_13 = arith.constant 0 : index
      %25 = vector.load %arg6[%c0_12, %c0_13] : memref<1x128xf32, #tpu.memory_space<vmem>>, vector<1x128xf32>
      %26 = vector.broadcast %24 : vector<8x1xf32> to vector<8x128xf32>
      %27 = vector.broadcast %25 : vector<1x128xf32> to vector<8x128xf32>
      %28 = arith.mulf %26, %27 : vector<8x128xf32>
      %29 = arith.mulf %16, %28 : vector<8x128xf32>
      %c0_14 = arith.constant 0 : index
      %c0_15 = arith.constant 0 : index
      %30 = vector.load %arg7[%c0_14, %c0_15] : memref<8x128xf32, #tpu.memory_space<vmem>>, vector<8x128xf32>
      tpu.vector_store %arg7[%c0_14, %c0_15], %29 {strides = array<i32>} : memref<8x128xf32, #tpu.memory_space<vmem>>, vector<8x128xf32>,
      %c0_16 = arith.constant 0 : index
      %c0_17 = arith.constant 0 : index
      %31 = vector.load %arg8[%c0_16, %c0_17] : memref<8x128xf32, #tpu.memory_space<vmem>>, vector<8x128xf32>
      tpu.vector_store %arg8[%c0_16, %c0_17], %16 {strides = array<i32>} : memref<8x128xf32, #tpu.memory_space<vmem>>, vector<8x128xf32>,
    } else {
    }
    return
  }
  func.func @transform_0(%arg0: i32, %arg1: i32) -> (i32, i32, i32) {
    %c0_i32 = arith.constant 0 : i32
    %c0_i32_0 = arith.constant 0 : i32
    return %arg1, %arg0, %c0_i32 : i32, i32, i32
  }
  func.func @transform_1(%arg0: i32, %arg1: i32) -> (i32, i32, i32) {
    %c0_i32 = arith.constant 0 : i32
    %c0_i32_0 = arith.constant 0 : i32
    %c0_i32_1 = arith.constant 0 : i32
    return %c0_i32, %arg0, %c0_i32_0 : i32, i32, i32
  }
  func.func @transform_2(%arg0: i32, %arg1: i32) -> (i32, i32) {
    %c0_i32 = arith.constant 0 : i32
    %c0_i32_0 = arith.constant 0 : i32
    return %arg0, %c0_i32 : i32, i32
  }
  func.func @transform_3(%arg0: i32, %arg1: i32) -> (i32, i32) {
    %c0_i32 = arith.constant 0 : i32
    %c0_i32_0 = arith.constant 0 : i32
    return %arg0, %c0_i32 : i32, i32
  }
  func.func @transform_4(%arg0: i32, %arg1: i32) -> (i32, i32) {
    %c0_i32 = arith.constant 0 : i32
    %c0_i32_0 = arith.constant 0 : i32
    %c0_i32_1 = arith.constant 0 : i32
    return %c0_i32, %c0_i32_0 : i32, i32
  }
  func.func @transform_5(%arg0: i32, %arg1: i32) -> (i32, i32) {
    %c0_i32 = arith.constant 0 : i32
    %c0_i32_0 = arith.constant 0 : i32
    return %arg0, %c0_i32 : i32, i32
  }
  func.func @transform_6(%arg0: i32, %arg1: i32) -> (i32, i32) {
    %c0_i32 = arith.constant 0 : i32
    %c0_i32_0 = arith.constant 0 : i32
    return %arg0, %c0_i32 : i32, i32
  }
}

</mosaic_0001>

<llo_original>
// kernel: tpu_custom_call.1
$region0: #{tpu_custom_call.1}
  #allocation0 [shape = 'u32[]', space=smem, size = 0x4, offset = 0x4, fixed_abs, tag = 'smem constant byte address 0x4 - core index']
  #allocation1 [shape = 'u32[144,128]{1,0:T(1,128)}', space=vmem, size = 0x12000, scoped, tag = 'internal scratch']
  #allocation2 [shape = 'f32[8,128]{1,0:T(8,128)}', space=vmem, size = 0x1000, scoped, tag = 'scratch operand']
  %s0 = inlined_call_operand.vmem [shape: f32[4,8,128], index: 0, kind: input, shape index: {}]
  %s1 = inlined_call_operand.vmem [shape: f32[4,8,1], index: 1, kind: input, shape index: {}]
  %s2 = inlined_call_operand.hbm [shape: f32[8,128], index: 2, kind: input, shape index: {}]
  %s3 = inlined_call_operand.vmem [shape: f32[8,128], index: 3, kind: input, shape index: {}]
  %s4 = inlined_call_operand.vmem [shape: f32[1,128], index: 4, kind: input, shape index: {}]
  %s5 = inlined_call_operand.hbm [shape: f32[8,128], index: 5, kind: output, shape index: {0}]
  %s6 = inlined_call_operand.hbm [shape: f32[8,128], index: 6, kind: output, shape index: {1}]
  %7 = xla_tuple %s5, %s6
  %s8 = sld [smem:[#allocation0]]
  $region77: #{tpu_custom_call.1} parent=0
    _
  %s10 = ssub.s32 1, %s8
  %s11 = scalar_select 0, %s10, %s8
  $region1: #{tpu_custom_call.1} parent=0
    #allocation3 [shape = 'u8[4096]{0}', space=vmem, size = 0x1000, scoped, tag = 'input window, operand 2, single buffered']
    #allocation4 [shape = 's32[2]{0}', space=sflag, size = 0x8, scoped, tag = 'scoped memory for tpu_custom_call.1']
    #allocation5 [shape = 's32[2]{0}', space=sflag, size = 0x8, scoped, tag = 'scoped memory for tpu_custom_call.1']
    #allocation6 [shape = 'u8[4096]{0}', space=vmem, size = 0x1000, scoped, tag = 'output window, operand 0, single buffered']
    #allocation7 [shape = 'u8[4096]{0}', space=vmem, size = 0x1000, scoped, tag = 'output window, operand 1, single buffered']
    #allocation8 [shape = 's32[1]{0}', space=sflag, size = 0x4, scoped, tag = 'scoped memory for tpu_custom_call.1']
    %12 = vsyncpa [#allocation4], 0
    %13 = vsyncpa [#allocation5], 0
    %14 = vsyncpa [#allocation8], 0
    loop: start=0, step=1, limit=6
    $region2: #{tpu_custom_call.1} parent=1 // loop_pre_header
      _
    $region3: #{tpu_custom_call.1} parent=1 // loop_header
      %s16 = sphi 0, %s20
      %p17 = scmp.ge.s32.totalorder %s16, 6
      %s23 = sphi 0, %s35
      %s24 = sphi 0, %s31
      %s25 = sphi 0, %s23
      %s26 = sphi 0, %s24
      %s27 = sphi 0, %s25
      %s28 = sphi 0, %s26
      %s40 = sphi 0, %s42
      %s43 = sphi 0, %s40
      %s44 = sphi 0, %s43
      %s60 = sphi 0, %s44
      %s66 = sphi 0, %s68
      %s69 = sphi 0, %s66
      %s70 = sphi 0, %s69
      %s86 = sphi 0, %s70
      %s92 = sphi 0, %s94
      %s95 = sphi 0, %s92
      %s96 = sphi 0, %s95
      %s112 = sphi 0, %s96
      %s118 = sphi 0, %s120
      %s121 = sphi 0, %s118
      %s122 = sphi 0, %s121
      %s138 = sphi 0, %s122
      %s142 = sphi 0, %s142
      %s144 = sphi 0, %s142
      %s145 = sphi 0, %s144
      %s159 = sphi 0, %s145
      %s165 = sphi 0, %s167
      %s168 = sphi 0, %s165
      %s169 = sphi 0, %s168
      %s185 = sphi 0, %s169
      %s191 = sphi 0, %s193
      %s194 = sphi 0, %s191
      %s195 = sphi 0, %s194
      %s211 = sphi 0, %s195
    $region4: #{tpu_custom_call.1} parent=1 // loop_header_branch
      %19 = sbr.rel (%p17) target = $region8
    $region5: #{tpu_custom_call.1} parent=1 // loop_body
      %s21 = ssub.s32 %s16, 1
      %s22 = ssub.s32 %s16, 2
      %s29 = sadd.s32 1, %s24
      %p30 = scmp.ge.s32.totalorder %s29, 4
      %s31 = scalar_select %p30, 0, %s29
      %s32 = sadd.s32 1, %s23
      %s33 = scalar_select %p30, %s32, %s23
      %p34 = scmp.ge.s32.totalorder %s33, 1
      %s35 = scalar_select %p34, 0, %s33
      %s36 = ssub.s32 %s24, %s31
      %s37 = ssub.s32 %s23, %s35
      %s38 = sor.u32 %s36, %s37
      %p39 = scmp.eq.s32.totalorder %s38, 0
      %s41 = sadd.s32 %s40, 1
      %s42 = scalar_select %p39, %s40, %s41
      %p45 = pneg %p39
      %p46 = scmp.eq.s32.totalorder %s16, 3
      %p47 = por %p45, %p46
      %p48 = scmp.ne.s32.totalorder %s40, %s43
      %p49 = scmp.eq.s32.totalorder %s16, 0
      %p50 = por %p48, %p49
      %p51 = scmp.ne.s32.totalorder %s40, %s43
      %p52 = scmp.eq.s32.totalorder %s21, 3
      %p53 = por %p51, %p52
      %p54 = scmp.ne.s32.totalorder %s43, %s44
      %p55 = scmp.eq.s32.totalorder %s21, 0
      %p56 = por %p54, %p55
      %p57 = scmp.ne.s32.totalorder %s43, %s44
      %p58 = scmp.eq.s32.totalorder %s22, 3
      %p59 = por %p57, %p58
      %p61 = scmp.ne.s32.totalorder %s44, %s60
      %p62 = scmp.eq.s32.totalorder %s22, 0
      %p63 = por %p61, %p62
      %s64 = ssub.s32 %s23, %s35
      %p65 = scmp.eq.s32.totalorder %s64, 0
      %s67 = sadd.s32 %s66, 1
      %s68 = scalar_select %p65, %s66, %s67
      %p71 = pneg %p65
      %p72 = scmp.eq.s32.totalorder %s16, 3
      %p73 = por %p71, %p72
      %p74 = scmp.ne.s32.totalorder %s66, %s69
      %p75 = scmp.eq.s32.totalorder %s16, 0
      %p76 = por %p74, %p75
      %p77 = scmp.ne.s32.totalorder %s66, %s69
      %p78 = scmp.eq.s32.totalorder %s21, 3
      %p79 = por %p77, %p78
      %p80 = scmp.ne.s32.totalorder %s69, %s70
      %p81 = scmp.eq.s32.totalorder %s21, 0
      %p82 = por %p80, %p81
      %p83 = scmp.ne.s32.totalorder %s69, %s70
      %p84 = scmp.eq.s32.totalorder %s22, 3
      %p85 = por %p83, %p84
      %p87 = scmp.ne.s32.totalorder %s70, %s86
      %p88 = scmp.eq.s32.totalorder %s22, 0
      %p89 = por %p87, %p88
      %s90 = ssub.s32 %s23, %s35
      %p91 = scmp.eq.s32.totalorder %s90, 0
      %s93 = sadd.s32 %s92, 1
      %s94 = scalar_select %p91, %s92, %s93
      %p97 = pneg %p91
      %p98 = scmp.eq.s32.totalorder %s16, 3
      %p99 = por %p97, %p98
      %p100 = scmp.ne.s32.totalorder %s92, %s95
      %p101 = scmp.eq.s32.totalorder %s16, 0
      %p102 = por %p100, %p101
      %p103 = scmp.ne.s32.totalorder %s92, %s95
      %p104 = scmp.eq.s32.totalorder %s21, 3
      %p105 = por %p103, %p104
      %p106 = scmp.ne.s32.totalorder %s95, %s96
      %p107 = scmp.eq.s32.totalorder %s21, 0
      %p108 = por %p106, %p107
      %p109 = scmp.ne.s32.totalorder %s95, %s96
      %p110 = scmp.eq.s32.totalorder %s22, 3
      %p111 = por %p109, %p110
      %p113 = scmp.ne.s32.totalorder %s96, %s112
      %p114 = scmp.eq.s32.totalorder %s22, 0
      %p115 = por %p113, %p114
      %s116 = ssub.s32 %s23, %s35
      %p117 = scmp.eq.s32.totalorder %s116, 0
      %s119 = sadd.s32 %s118, 1
      %s120 = scalar_select %p117, %s118, %s119
      %p123 = pneg %p117
      %p124 = scmp.eq.s32.totalorder %s16, 3
      %p125 = por %p123, %p124
      %p126 = scmp.ne.s32.totalorder %s118, %s121
      %p127 = scmp.eq.s32.totalorder %s16, 0
      %p128 = por %p126, %p127
      %p129 = scmp.ne.s32.totalorder %s118, %s121
      %p130 = scmp.eq.s32.totalorder %s21, 3
      %p131 = por %p129, %p130
      %p132 = scmp.ne.s32.totalorder %s121, %s122
      %p133 = scmp.eq.s32.totalorder %s21, 0
      %p134 = por %p132, %p133
      %p135 = scmp.ne.s32.totalorder %s121, %s122
      %p136 = scmp.eq.s32.totalorder %s22, 3
      %p137 = por %p135, %p136
      %p139 = scmp.ne.s32.totalorder %s122, %s138
      %p140 = scmp.eq.s32.totalorder %s22, 0
      %p141 = por %p139, %p140
      %s143 = sadd.s32 %s142, 1
      %p146 = scmp.eq.s32.totalorder %s16, 3
      %p147 = scmp.ne.s32.totalorder %s142, %s144
      %p148 = scmp.eq.s32.totalorder %s16, 0
      %p149 = por %p147, %p148
      %p150 = scmp.ne.s32.totalorder %s142, %s144
      %p151 = scmp.eq.s32.totalorder %s21, 3
      %p152 = por %p150, %p151
      %p153 = scmp.ne.s32.totalorder %s144, %s145
      %p154 = scmp.eq.s32.totalorder %s21, 0
      %p155 = por %p153, %p154
      %p156 = scmp.ne.s32.totalorder %s144, %s145
      %p157 = scmp.eq.s32.totalorder %s22, 3
      %p158 = por %p156, %p157
      %p160 = scmp.ne.s32.totalorder %s145, %s159
      %p161 = scmp.eq.s32.totalorder %s22, 0
      %p162 = por %p160, %p161
      %s163 = ssub.s32 %s23, %s35
      %p164 = scmp.eq.s32.totalorder %s163, 0
      %s166 = sadd.s32 %s165, 1
      %s167 = scalar_select %p164, %s165, %s166
      %p170 = pneg %p164
      %p171 = scmp.eq.s32.totalorder %s16, 3
      %p172 = por %p170, %p171
      %p173 = scmp.ne.s32.totalorder %s165, %s168
      %p174 = scmp.eq.s32.totalorder %s16, 0
      %p175 = por %p173, %p174
      %p176 = scmp.ne.s32.totalorder %s165, %s168
      %p177 = scmp.eq.s32.totalorder %s21, 3
      %p178 = por %p176, %p177
      %p179 = scmp.ne.s32.totalorder %s168, %s169
      %p180 = scmp.eq.s32.totalorder %s21, 0
      %p181 = por %p179, %p180
      %p182 = scmp.ne.s32.totalorder %s168, %s169
      %p183 = scmp.eq.s32.totalorder %s22, 3
      %p184 = por %p182, %p183
      %p186 = scmp.ne.s32.totalorder %s169, %s185
      %p187 = scmp.eq.s32.totalorder %s22, 0
      %p188 = por %p186, %p187
      %s189 = ssub.s32 %s23, %s35
      %p190 = scmp.eq.s32.totalorder %s189, 0
      %s192 = sadd.s32 %s191, 1
      %s193 = scalar_select %p190, %s191, %s192
      %p196 = pneg %p190
      %p197 = scmp.eq.s32.totalorder %s16, 3
      %p198 = por %p196, %p197
      %p199 = scmp.ne.s32.totalorder %s191, %s194
      %p200 = scmp.eq.s32.totalorder %s16, 0
      %p201 = por %p199, %p200
      %p202 = scmp.ne.s32.totalorder %s191, %s194
      %p203 = scmp.eq.s32.totalorder %s21, 3
      %p204 = por %p202, %p203
      %p205 = scmp.ne.s32.totalorder %s194, %s195
      %p206 = scmp.eq.s32.totalorder %s21, 0
      %p207 = por %p205, %p206
      %p208 = scmp.ne.s32.totalorder %s194, %s195
      %p209 = scmp.eq.s32.totalorder %s22, 3
      %p210 = por %p208, %p209
      %p212 = scmp.ne.s32.totalorder %s195, %s211
      %p213 = scmp.eq.s32.totalorder %s22, 0
      %p214 = por %p212, %p213
      %p215 = scmp.le.s32.totalorder 1, %s16
      %p216 = scmp.lt.s32.totalorder %s16, 5
      %p217 = pnand %p215, %p216
      %p218 = pneg %p217
      // Predicated region
      $region9: #{tpu_custom_call.1} parent=5 // pred_check
        _
      $region10: #{tpu_custom_call.1} parent=5 // pred_check_branch
        %220 = sbr.rel (%p217) target = $region12
      $region11: #{tpu_custom_call.1} parent=5 // pred_region
        %s221 = ssub.s32 %s16, 1
        // Predicated region
        $region13: #{tpu_custom_call.1} parent=11 // pred_check
          %p222 = pneg %p82
        $region14: #{tpu_custom_call.1} parent=11 // pred_check_branch
          %224 = sbr.rel (%p222) target = $region16
        $region15: #{tpu_custom_call.1} parent=11 // pred_region
          %p225 = scmp.lt.s32.totalorder %s25, 0
          %s226 = scalar_select %p225, %s25, 0
          %s227 = smul.addr %s226, 8
          %s228 = scalar_lea.vmem %s1, %s227
        $region16: #{tpu_custom_call.1} parent=11 // pred_fallthru
          _
        // Predicated region
        $region17: #{tpu_custom_call.1} parent=11 // pred_check
          %p229 = pneg %p108
        $region18: #{tpu_custom_call.1} parent=11 // pred_check_branch
          %231 = sbr.rel (%p229) target = $region20
        $region19: #{tpu_custom_call.1} parent=11 // pred_region
          %s233 = ssub.s32 128, 128
          %234 = vsyncadd [#allocation4], %s233
          %s235 = smul.addr %s25, 128
          %s236 = scalar_lea.hbm %s2, %s235
          %s238 = sshll.u32 [#allocation3], 4
          %s239 = int_to_ptr.vmem [resolvable:$true] %s238
          %241 = dma.hbm_to_vmem [thread:$0]  %s236, 128, %s239, [#allocation4]
        $region20: #{tpu_custom_call.1} parent=11 // pred_fallthru
          _
        // Predicated region
        $region21: #{tpu_custom_call.1} parent=11 // pred_check
          %p242 = pneg %p134
        $region22: #{tpu_custom_call.1} parent=11 // pred_check_branch
          %244 = sbr.rel (%p242) target = $region24
        $region23: #{tpu_custom_call.1} parent=11 // pred_region
          %p245 = scmp.lt.s32.totalorder %s25, 0
          %s246 = scalar_select %p245, %s25, 0
          %s247 = smul.addr %s246, 8
          %s248 = scalar_lea.vmem %s3, %s247
        $region24: #{tpu_custom_call.1} parent=11 // pred_fallthru
          _
        // Predicated region
        $region25: #{tpu_custom_call.1} parent=11 // pred_check
          %p249 = pneg %p155
        $region26: #{tpu_custom_call.1} parent=11 // pred_check_branch
          %251 = sbr.rel (%p249) target = $region28
        $region27: #{tpu_custom_call.1} parent=11 // pred_region
          _
        $region28: #{tpu_custom_call.1} parent=11 // pred_fallthru
          _
      $region12: #{tpu_custom_call.1} parent=5 // pred_fallthru
        _
      %p252 = scmp.lt.s32.totalorder %s16, 4
      // Predicated region
      $region29: #{tpu_custom_call.1} parent=5 // pred_check
        %p253 = pneg %p252
      $region30: #{tpu_custom_call.1} parent=5 // pred_check_branch
        %255 = sbr.rel (%p253) target = $region32
      $region31: #{tpu_custom_call.1} parent=5 // pred_region
        // Predicated region
        $region33: #{tpu_custom_call.1} parent=31 // pred_check
          %p256 = pneg %p50
        $region34: #{tpu_custom_call.1} parent=31 // pred_check_branch
          %258 = sbr.rel (%p256) target = $region36
        $region35: #{tpu_custom_call.1} parent=31 // pred_region
          %p259 = scmp.lt.s32.totalorder %s24, 3
          %s260 = scalar_select %p259, %s24, 3
          %p261 = scmp.lt.s32.totalorder %s23, 0
          %s262 = scalar_select %p261, %s23, 0
          %s263 = sadd.s32 %s262, %s260
          %s264 = smul.addr %s263, 8
          %s265 = scalar_lea.vmem %s0, %s264
        $region36: #{tpu_custom_call.1} parent=31 // pred_fallthru
          _
      $region32: #{tpu_custom_call.1} parent=5 // pred_fallthru
        _
      %p266 = scmp.le.s32.totalorder 1, %s16
      %p267 = scmp.lt.s32.totalorder %s16, 5
      %p268 = pnand %p266, %p267
      %p269 = pneg %p268
      // Predicated region
      $region37: #{tpu_custom_call.1} parent=5 // pred_check
        _
      $region38: #{tpu_custom_call.1} parent=5 // pred_check_branch
        %271 = sbr.rel (%p268) target = $region40
      $region39: #{tpu_custom_call.1} parent=5 // pred_region
        %s272 = ssub.s32 %s16, 1
        // Predicated region
        $region41: #{tpu_custom_call.1} parent=39 // pred_check
          %p273 = pneg %p108
        $region42: #{tpu_custom_call.1} parent=39 // pred_check_branch
          %275 = sbr.rel (%p273) target = $region44
        $region43: #{tpu_custom_call.1} parent=39 // pred_region
          %276 = dma.done [#allocation4], 128
        $region44: #{tpu_custom_call.1} parent=39 // pred_fallthru
          _
        %p277 = scmp.lt.s32.totalorder %s26, 3
        %s278 = scalar_select %p277, %s26, 3
        %p279 = scmp.lt.s32.totalorder %s25, 0
        %s280 = scalar_select %p279, %s25, 0
        %s281 = sadd.s32 %s280, %s278
        %s282 = smul.addr %s281, 8
        %s283 = scalar_lea.vmem %s0, %s282
        %p284 = pneg %p56
        %p285 = pneg %p53
        %p286 = scmp.lt.s32.totalorder %s25, 0
        %s287 = scalar_select %p286, %s25, 0
        %s288 = smul.addr %s287, 8
        %s289 = scalar_lea.vmem %s1, %s288
        %p290 = pneg %p82
        %p291 = pneg %p79
        %p292 = pneg %p108
        %p293 = pneg %p105
        %p294 = scmp.lt.s32.totalorder %s25, 0
        %s295 = scalar_select %p294, %s25, 0
        %s296 = smul.addr %s295, 8
        %s297 = scalar_lea.vmem %s3, %s296
        %p298 = pneg %p134
        %p299 = pneg %p131
        %p300 = pneg %p155
        %p301 = pneg %p152
        %p302 = pneg %p181
        %p303 = pneg %p178
        %p304 = pneg %p207
        %p305 = pneg %p204
        %p306 = scmp.lt.s32.totalorder %s26, 3
        %s307 = scalar_select %p306, %s26, 3
        %p308 = scmp.lt.s32.totalorder %s25, 0
        %s309 = scalar_select %p308, %s25, 0
        %s310 = sadd.s32 %s309, %s307
        %s311 = smul.addr %s310, 8
        %s312 = scalar_lea.vmem %s0, %s311
        %p313 = scmp.lt.s32.totalorder %s25, 0
        %s314 = scalar_select %p313, %s25, 0
        %s315 = smul.addr %s314, 8
        %s316 = scalar_lea.vmem %s1, %s315
        %p317 = scmp.lt.s32.totalorder %s25, 0
        %s318 = scalar_select %p317, %s25, 0
        %s319 = smul.addr %s318, 8
        %s320 = scalar_lea.vmem %s3, %s319
        %v321 = vld [vmem:[%s312] sm:$0xff]
        %s322 = smul.u32 %s26, 8
        %s323 = scalar_lea.vmem %s316, %s322
        %v324 = vld [vmem:[%s323] sm:$0xff]
        %326 = vset.pattern.permute.xlu0 0
        %327 = vperm.xlu0 %326, %v324
        %v328 = vpop.permute.xlu0 %327
        %v330 = vmul.f32 %v321, %v328
        %p331 = scmp.eq.s32.totalorder %s26, 0
        // Predicated region
        $region45: #{tpu_custom_call.1} parent=39 // pred_check
          %p332 = pneg %p331
        $region46: #{tpu_custom_call.1} parent=39 // pred_check_branch
          %334 = sbr.rel (%p332) target = $region48
        $region47: #{tpu_custom_call.1} parent=39 // pred_region
          %v335 = vld [vmem:[#allocation3] sm:$0xff]
          %v336 = vadd.f32 %v330, %v335
          %v337 = vld [vmem:[%s320] sm:$0xff]
          %v338 = vadd.f32 %v336, %v337
          %339 = vst [vmem:[#allocation2] sm:$0xff] %v338
        $region48: #{tpu_custom_call.1} parent=39 // pred_fallthru
          _
        %p340 = scmp.ne.s32.totalorder %s26, 0
        // Predicated region
        $region49: #{tpu_custom_call.1} parent=39 // pred_check
          %p341 = pneg %p340
        $region50: #{tpu_custom_call.1} parent=39 // pred_check_branch
          %343 = sbr.rel (%p341) target = $region52
        $region51: #{tpu_custom_call.1} parent=39 // pred_region
          %v344 = vld [vmem:[#allocation2] sm:$0xff]
          %v345 = vadd.f32 %v344, %v330
          %346 = vst [vmem:[#allocation2] sm:$0xff] %v345
        $region52: #{tpu_custom_call.1} parent=39 // pred_fallthru
          _
        %p347 = scmp.eq.s32.totalorder %s26, 3
        // Predicated region
        $region53: #{tpu_custom_call.1} parent=39 // pred_check
          %p348 = pneg %p347
        $region54: #{tpu_custom_call.1} parent=39 // pred_check_branch
          %350 = sbr.rel (%p348) target = $region56
        $region55: #{tpu_custom_call.1} parent=39 // pred_region
          %v351 = vld [vmem:[#allocation2] sm:$0xff]
          %v352 = vmul.f32 %v351, %v351
          %353 = vadd.xlane.f32.xlu0 %v352
          %v354 = vpop.xlane.xlu0 %353
          %v355 = vrcp.pop 128.0
          %v356 = vmul.f32 %v354, %v355
          %v357 = vadd.f32 %v356, 1e-06
          %v358 = vrsqrt.pop %v357
          %v359 = vld [vmem:[%s4] sm:$0x1]
          %v361 = vlaneseq
          %v362 = vshrl.u32 %v361, 7
          %v363 = vsub.s32 0, %v362
          %v364 = vrot.slane %v359, %v363
          %v366 = vmul.f32 %v358, %v364
          %v367 = vmul.f32 %v351, %v366
          %368 = vst [vmem:[#allocation6] sm:$0xff] %v367
          %369 = vst [vmem:[#allocation7] sm:$0xff] %v351
        $region56: #{tpu_custom_call.1} parent=39 // pred_fallthru
          _
        // Predicated region
        $region57: #{tpu_custom_call.1} parent=39 // pred_check
          %p370 = pneg %p178
        $region58: #{tpu_custom_call.1} parent=39 // pred_check_branch
          %372 = sbr.rel (%p370) target = $region60
        $region59: #{tpu_custom_call.1} parent=39 // pred_region
          %s374 = ssub.s32 128, 128
          %375 = vsyncadd [#allocation5], %s374
          %s376 = smul.addr %s25, 128
          %s377 = scalar_lea.hbm %s5, %s376
          %s379 = sshll.u32 [#allocation6], 4
          %s380 = int_to_ptr.vmem [resolvable:$true] %s379
          %382 = dma.vmem_to_hbm [thread:$0]  %s380, 128, %s377, [#allocation5]
        $region60: #{tpu_custom_call.1} parent=39 // pred_fallthru
          _
        // Predicated region
        $region61: #{tpu_custom_call.1} parent=39 // pred_check
          %p383 = pneg %p204
        $region62: #{tpu_custom_call.1} parent=39 // pred_check_branch
          %385 = sbr.rel (%p383) target = $region64
        $region63: #{tpu_custom_call.1} parent=39 // pred_region
          %s387 = ssub.s32 128, 128
          %388 = vsyncadd [#allocation8], %s387
          %s389 = smul.addr %s25, 128
          %s390 = scalar_lea.hbm %s6, %s389
          %s392 = sshll.u32 [#allocation7], 4
          %s393 = int_to_ptr.vmem [resolvable:$true] %s392
          %395 = dma.vmem_to_hbm [thread:$0]  %s393, 128, %s390, [#allocation8]
        $region64: #{tpu_custom_call.1} parent=39 // pred_fallthru
          _
        // Predicated region
        $region65: #{tpu_custom_call.1} parent=39 // pred_check
          %p396 = pneg %p178
        $region66: #{tpu_custom_call.1} parent=39 // pred_check_branch
          %398 = sbr.rel (%p396) target = $region68
        $region67: #{tpu_custom_call.1} parent=39 // pred_region
          %399 = dma.done [#allocation5], 128
        $region68: #{tpu_custom_call.1} parent=39 // pred_fallthru
          _
        // Predicated region
        $region69: #{tpu_custom_call.1} parent=39 // pred_check
          %p400 = pneg %p204
        $region70: #{tpu_custom_call.1} parent=39 // pred_check_branch
          %402 = sbr.rel (%p400) target = $region72
        $region71: #{tpu_custom_call.1} parent=39 // pred_region
          %403 = dma.done [#allocation8], 128
        $region72: #{tpu_custom_call.1} parent=39 // pred_fallthru
          _
      $region40: #{tpu_custom_call.1} parent=5 // pred_fallthru
        _
      %p404 = scmp.le.s32.totalorder 2, %s16
      // Predicated region
      $region73: #{tpu_custom_call.1} parent=5 // pred_check
        %p405 = pneg %p404
      $region74: #{tpu_custom_call.1} parent=5 // pred_check_branch
        %407 = sbr.rel (%p405) target = $region76
      $region75: #{tpu_custom_call.1} parent=5 // pred_region
        %s408 = ssub.s32 %s16, 2
      $region76: #{tpu_custom_call.1} parent=5 // pred_fallthru
        _
    $region6: #{tpu_custom_call.1} parent=1 // loop_footer
      %s20 = sadd.s32 1, %s16
    $region7: #{tpu_custom_call.1} parent=1 // loop_footer_branch
      %15 = sbr.rel target = $region3
    $region8: #{tpu_custom_call.1} parent=1 // loop_exit
      _
    %409 = vsyncpa [#allocation4], 1
    %s410 = scalar_lea.sflag [#allocation4], 1
    %411 = vsyncpa %s410, 1
    %412 = vsyncpa [#allocation5], 1
    %s413 = scalar_lea.sflag [#allocation5], 1
    %414 = vsyncpa %s413, 1
    %415 = vsyncpa [#allocation8], 1

// kernel: tpu_custom_call.1
$region0: #{tpu_custom_call.1}
  #allocation0 [shape = 'u32[]', space=smem, size = 0x4, offset = 0x4, fixed_abs, tag = 'smem constant byte address 0x4 - core index']
  #allocation1 [shape = 'u32[144,128]{1,0:T(1,128)}', space=vmem, size = 0x12000, scoped, tag = 'internal scratch']
  #allocation2 [shape = 'f32[8,128]{1,0:T(8,128)}', space=vmem, size = 0x1000, scoped, tag = 'scratch operand']
  %s0 = inlined_call_operand.vmem [shape: f32[4,8,128], index: 0, kind: input, shape index: {}]
  %s1 = inlined_call_operand.vmem [shape: f32[4,8,1], index: 1, kind: input, shape index: {}]
  %s2 = inlined_call_operand.hbm [shape: f32[8,128], index: 2, kind: input, shape index: {}]
  %s3 = inlined_call_operand.vmem [shape: f32[8,128], index: 3, kind: input, shape index: {}]
  %s4 = inlined_call_operand.vmem [shape: f32[1,128], index: 4, kind: input, shape index: {}]
  %s5 = inlined_call_operand.hbm [shape: f32[8,128], index: 5, kind: output, shape index: {0}]
  %s6 = inlined_call_operand.hbm [shape: f32[8,128], index: 6, kind: output, shape index: {1}]
  %7 = xla_tuple %s5, %s6
  %s8 = sld [smem:[#allocation0]]
  $region77: #{tpu_custom_call.1} parent=0
    _
  %s10 = ssub.s32 1, %s8
  %s11 = scalar_select 0, %s10, %s8
  $region1: #{tpu_custom_call.1} parent=0
    #allocation3 [shape = 'u8[4096]{0}', space=vmem, size = 0x1000, scoped, tag = 'input window, operand 2, single buffered']
    #allocation4 [shape = 's32[2]{0}', space=sflag, size = 0x8, scoped, tag = 'scoped memory for tpu_custom_call.1']
    #allocation5 [shape = 's32[2]{0}', space=sflag, size = 0x8, scoped, tag = 'scoped memory for tpu_custom_call.1']
    #allocation6 [shape = 'u8[4096]{0}', space=vmem, size = 0x1000, scoped, tag = 'output window, operand 0, single buffered']
    #allocation7 [shape = 'u8[4096]{0}', space=vmem, size = 0x1000, scoped, tag = 'output window, operand 1, single buffered']
    #allocation8 [shape = 's32[1]{0}', space=sflag, size = 0x4, scoped, tag = 'scoped memory for tpu_custom_call.1']
    %12 = vsyncpa [#allocation4], 0
    %13 = vsyncpa [#allocation5], 0
    %14 = vsyncpa [#allocation8], 0
    loop: start=0, step=1, limit=6
    $region2: #{tpu_custom_call.1} parent=1 // loop_pre_header
      _
    $region3: #{tpu_custom_call.1} parent=1 // loop_header
      %s16 = sphi 0, %s20
      %p17 = scmp.ge.s32.totalorder %s16, 6
      %s23 = sphi 0, %s35
      %s24 = sphi 0, %s31
      %s25 = sphi 0, %s23
      %s26 = sphi 0, %s24
      %s27 = sphi 0, %s25
      %s28 = sphi 0, %s26
      %s40 = sphi 0, %s42
      %s43 = sphi 0, %s40
      %s44 = sphi 0, %s43
      %s60 = sphi 0, %s44
      %s66 = sphi 0, %s68
      %s69 = sphi 0, %s66
      %s70 = sphi 0, %s69
      %s86 = sphi 0, %s70
      %s92 = sphi 0, %s94
      %s95 = sphi 0, %s92
      %s96 = sphi 0, %s95
      %s112 = sphi 0, %s96
      %s118 = sphi 0, %s120
      %s121 = sphi 0, %s118
      %s122 = sphi 0, %s121
      %s138 = sphi 0, %s122
      %s142 = sphi 0, %s142
      %s144 = sphi 0, %s142
      %s145 = sphi 0, %s144
      %s159 = sphi 0, %s145
      %s165 = sphi 0, %s167
      %s168 = sphi 0, %s165
      %s169 = sphi 0, %s168
      %s185 = sphi 0, %s169
      %s191 = sphi 0, %s193
      %s194 = sphi 0, %s191
      %s195 = sphi 0, %s194
      %s211 = sphi 0, %s195
    $region4: #{tpu_custom_call.1} parent=1 // loop_header_branch
      %19 = sbr.rel (%p17) target = $region8
    $region5: #{tpu_custom_call.1} parent=1 // loop_body
      %s21 = ssub.s32 %s16, 1
      %s22 = ssub.s32 %s16, 2
      %s29 = sadd.s32 1, %s24
      %p30 = scmp.ge.s32.totalorder %s29, 4
      %s31 = scalar_select %p30, 0, %s29
      %s32 = sadd.s32 1, %s23
      %s33 = scalar_select %p30, %s32, %s23
      %p34 = scmp.ge.s32.totalorder %s33, 1
      %s35 = scalar_select %p34, 0, %s33
      %s36 = ssub.s32 %s24, %s31
      %s37 = ssub.s32 %s23, %s35
      %s38 = sor.u32 %s36, %s37
      %p39 = scmp.eq.s32.totalorder %s38, 0
      %s41 = sadd.s32 %s40, 1
      %s42 = scalar_select %p39, %s40, %s41
      %p45 = pneg %p39
      %p46 = scmp.eq.s32.totalorder %s16, 3
      %p47 = por %p45, %p46
      %p48 = scmp.ne.s32.totalorder %s40, %s43
      %p49 = scmp.eq.s32.totalorder %s16, 0
      %p50 = por %p48, %p49
      %p51 = scmp.ne.s32.totalorder %s40, %s43
      %p52 = scmp.eq.s32.totalorder %s21, 3
      %p53 = por %p51, %p52
      %p54 = scmp.ne.s32.totalorder %s43, %s44
      %p55 = scmp.eq.s32.totalorder %s21, 0
      %p56 = por %p54, %p55
      %p57 = scmp.ne.s32.totalorder %s43, %s44
      %p58 = scmp.eq.s32.totalorder %s22, 3
      %p59 = por %p57, %p58
      %p61 = scmp.ne.s32.totalorder %s44, %s60
      %p62 = scmp.eq.s32.totalorder %s22, 0
      %p63 = por %p61, %p62
      %s64 = ssub.s32 %s23, %s35
      %p65 = scmp.eq.s32.totalorder %s64, 0
      %s67 = sadd.s32 %s66, 1
      %s68 = scalar_select %p65, %s66, %s67
      %p71 = pneg %p65
      %p72 = scmp.eq.s32.totalorder %s16, 3
      %p73 = por %p71, %p72
      %p74 = scmp.ne.s32.totalorder %s66, %s69
      %p75 = scmp.eq.s32.totalorder %s16, 0
      %p76 = por %p74, %p75
      %p77 = scmp.ne.s32.totalorder %s66, %s69
      %p78 = scmp.eq.s32.totalorder %s21, 3
      %p79 = por %p77, %p78
      %p80 = scmp.ne.s32.totalorder %s69, %s70
      %p81 = scmp.eq.s32.totalorder %s21, 0
      %p82 = por %p80, %p81
      %p83 = scmp.ne.s32.totalorder %s69, %s70
      %p84 = scmp.eq.s32.totalorder %s22, 3
      %p85 = por %p83, %p84
      %p87 = scmp.ne.s32.totalorder %s70, %s86
      %p88 = scmp.eq.s32.totalorder %s22, 0
      %p89 = por %p87, %p88
      %s90 = ssub.s32 %s23, %s35
      %p91 = scmp.eq.s32.totalorder %s90, 0
      %s93 = sadd.s32 %s92, 1
      %s94 = scalar_select %p91, %s92, %s93
      %p97 = pneg %p91
      %p98 = scmp.eq.s32.totalorder %s16, 3
      %p99 = por %p97, %p98
      %p100 = scmp.ne.s32.totalorder %s92, %s95
      %p101 = scmp.eq.s32.totalorder %s16, 0
      %p102 = por %p100, %p101
      %p103 = scmp.ne.s32.totalorder %s92, %s95
      %p104 = scmp.eq.s32.totalorder %s21, 3
      %p105 = por %p103, %p104
      %p106 = scmp.ne.s32.totalorder %s95, %s96
      %p107 = scmp.eq.s32.totalorder %s21, 0
      %p108 = por %p106, %p107
      %p109 = scmp.ne.s32.totalorder %s95, %s96
      %p110 = scmp.eq.s32.totalorder %s22, 3
      %p111 = por %p109, %p110
      %p113 = scmp.ne.s32.totalorder %s96, %s112
      %p114 = scmp.eq.s32.totalorder %s22, 0
      %p115 = por %p113, %p114
      %s116 = ssub.s32 %s23, %s35
      %p117 = scmp.eq.s32.totalorder %s116, 0
      %s119 = sadd.s32 %s118, 1
      %s120 = scalar_select %p117, %s118, %s119
      %p123 = pneg %p117
      %p124 = scmp.eq.s32.totalorder %s16, 3
      %p125 = por %p123, %p124
      %p126 = scmp.ne.s32.totalorder %s118, %s121
      %p127 = scmp.eq.s32.totalorder %s16, 0
      %p128 = por %p126, %p127
      %p129 = scmp.ne.s32.totalorder %s118, %s121
      %p130 = scmp.eq.s32.totalorder %s21, 3
      %p131 = por %p129, %p130
      %p132 = scmp.ne.s32.totalorder %s121, %s122
      %p133 = scmp.eq.s32.totalorder %s21, 0
      %p134 = por %p132, %p133
      %p135 = scmp.ne.s32.totalorder %s121, %s122
      %p136 = scmp.eq.s32.totalorder %s22, 3
      %p137 = por %p135, %p136
      %p139 = scmp.ne.s32.totalorder %s122, %s138
      %p140 = scmp.eq.s32.totalorder %s22, 0
      %p141 = por %p139, %p140
      %s143 = sadd.s32 %s142, 1
      %p146 = scmp.eq.s32.totalorder %s16, 3
      %p147 = scmp.ne.s32.totalorder %s142, %s144
      %p148 = scmp.eq.s32.totalorder %s16, 0
      %p149 = por %p147, %p148
      %p150 = scmp.ne.s32.totalorder %s142, %s144
      %p151 = scmp.eq.s32.totalorder %s21, 3
      %p152 = por %p150, %p151
      %p153 = scmp.ne.s32.totalorder %s144, %s145
      %p154 = scmp.eq.s32.totalorder %s21, 0
      %p155 = por %p153, %p154
      %p156 = scmp.ne.s32.totalorder %s144, %s145
      %p157 = scmp.eq.s32.totalorder %s22, 3
      %p158 = por %p156, %p157
      %p160 = scmp.ne.s32.totalorder %s145, %s159
      %p161 = scmp.eq.s32.totalorder %s22, 0
      %p162 = por %p160, %p161
      %s163 = ssub.s32 %s23, %s35
      %p164 = scmp.eq.s32.totalorder %s163, 0
      %s166 = sadd.s32 %s165, 1
      %s167 = scalar_select %p164, %s165, %s166
      %p170 = pneg %p164
      %p171 = scmp.eq.s32.totalorder %s16, 3
      %p172 = por %p170, %p171
      %p173 = scmp.ne.s32.totalorder %s165, %s168
      %p174 = scmp.eq.s32.totalorder %s16, 0
      %p175 = por %p173, %p174
      %p176 = scmp.ne.s32.totalorder %s165, %s168
      %p177 = scmp.eq.s32.totalorder %s21, 3
      %p178 = por %p176, %p177
      %p179 = scmp.ne.s32.totalorder %s168, %s169
      %p180 = scmp.eq.s32.totalorder %s21, 0
      %p181 = por %p179, %p180
      %p182 = scmp.ne.s32.totalorder %s168, %s169
      %p183 = scmp.eq.s32.totalorder %s22, 3
      %p184 = por %p182, %p183
      %p186 = scmp.ne.s32.totalorder %s169, %s185
      %p187 = scmp.eq.s32.totalorder %s22, 0
      %p188 = por %p186, %p187
      %s189 = ssub.s32 %s23, %s35
      %p190 = scmp.eq.s32.totalorder %s189, 0
      %s192 = sadd.s32 %s191, 1
      %s193 = scalar_select %p190, %s191, %s192
      %p196 = pneg %p190
      %p197 = scmp.eq.s32.totalorder %s16, 3
      %p198 = por %p196, %p197
      %p199 = scmp.ne.s32.totalorder %s191, %s194
      %p200 = scmp.eq.s32.totalorder %s16, 0
      %p201 = por %p199, %p200
      %p202 = scmp.ne.s32.totalorder %s191, %s194
      %p203 = scmp.eq.s32.totalorder %s21, 3
      %p204 = por %p202, %p203
      %p205 = scmp.ne.s32.totalorder %s194, %s195
      %p206 = scmp.eq.s32.totalorder %s21, 0
      %p207 = por %p205, %p206
      %p208 = scmp.ne.s32.totalorder %s194, %s195
      %p209 = scmp.eq.s32.totalorder %s22, 3
      %p210 = por %p208, %p209
      %p212 = scmp.ne.s32.totalorder %s195, %s211
      %p213 = scmp.eq.s32.totalorder %s22, 0
      %p214 = por %p212, %p213
      %p215 = scmp.le.s32.totalorder 1, %s16
      %p216 = scmp.lt.s32.totalorder %s16, 5
      %p217 = pnand %p215, %p216
      %p218 = pneg %p217
      // Predicated region
      $region9: #{tpu_custom_call.1} parent=5 // pred_check
        _
      $region10: #{tpu_custom_call.1} parent=5 // pred_check_branch
        %220 = sbr.rel (%p217) target = $region12
      $region11: #{tpu_custom_call.1} parent=5 // pred_region
        %s221 = ssub.s32 %s16, 1
        // Predicated region
        $region13: #{tpu_custom_call.1} parent=11 // pred_check
          %p222 = pneg %p82
        $region14: #{tpu_custom_call.1} parent=11 // pred_check_branch
          %224 = sbr.rel (%p222) target = $region16
        $region15: #{tpu_custom_call.1} parent=11 // pred_region
          %p225 = scmp.lt.s32.totalorder %s25, 0
          %s226 = scalar_select %p225, %s25, 0
          %s227 = smul.addr %s226, 8
          %s228 = scalar_lea.vmem %s1, %s227
        $region16: #{tpu_custom_call.1} parent=11 // pred_fallthru
          _
        // Predicated region
        $region17: #{tpu_custom_call.1} parent=11 // pred_check
          %p229 = pneg %p108
        $region18: #{tpu_custom_call.1} parent=11 // pred_check_branch
          %231 = sbr.rel (%p229) target = $region20
        $region19: #{tpu_custom_call.1} parent=11 // pred_region
          %s233 = ssub.s32 128, 128
          %234 = vsyncadd [#allocation4], %s233
          %s235 = smul.addr %s25, 128
          %s236 = scalar_lea.hbm %s2, %s235
          %s238 = sshll.u32 [#allocation3], 4
          %s239 = int_to_ptr.vmem [resolvable:$true] %s238
          %241 = dma.hbm_to_vmem [thread:$0]  %s236, 128, %s239, [#allocation4]
        $region20: #{tpu_custom_call.1} parent=11 // pred_fallthru
          _
        // Predicated region
        $region21: #{tpu_custom_call.1} parent=11 // pred_check
          %p242 = pneg %p134
        $region22: #{tpu_custom_call.1} parent=11 // pred_check_branch
          %244 = sbr.rel (%p242) target = $region24
        $region23: #{tpu_custom_call.1} parent=11 // pred_region
          %p245 = scmp.lt.s32.totalorder %s25, 0
          %s246 = scalar_select %p245, %s25, 0
          %s247 = smul.addr %s246, 8
          %s248 = scalar_lea.vmem %s3, %s247
        $region24: #{tpu_custom_call.1} parent=11 // pred_fallthru
          _
        // Predicated region
        $region25: #{tpu_custom_call.1} parent=11 // pred_check
          %p249 = pneg %p155
        $region26: #{tpu_custom_call.1} parent=11 // pred_check_branch
          %251 = sbr.rel (%p249) target = $region28
        $region27: #{tpu_custom_call.1} parent=11 // pred_region
          _
        $region28: #{tpu_custom_call.1} parent=11 // pred_fallthru
          _
      $region12: #{tpu_custom_call.1} parent=5 // pred_fallthru
        _
      %p252 = scmp.lt.s32.totalorder %s16, 4
      // Predicated region
      $region29: #{tpu_custom_call.1} parent=5 // pred_check
        %p253 = pneg %p252
      $region30: #{tpu_custom_call.1} parent=5 // pred_check_branch
        %255 = sbr.rel (%p253) target = $region32
      $region31: #{tpu_custom_call.1} parent=5 // pred_region
        // Predicated region
        $region33: #{tpu_custom_call.1} parent=31 // pred_check
          %p256 = pneg %p50
        $region34: #{tpu_custom_call.1} parent=31 // pred_check_branch
          %258 = sbr.rel (%p256) target = $region36
        $region35: #{tpu_custom_call.1} parent=31 // pred_region
          %p259 = scmp.lt.s32.totalorder %s24, 3
          %s260 = scalar_select %p259, %s24, 3
          %p261 = scmp.lt.s32.totalorder %s23, 0
          %s262 = scalar_select %p261, %s23, 0
          %s263 = sadd.s32 %s262, %s260
          %s264 = smul.addr %s263, 8
          %s265 = scalar_lea.vmem %s0, %s264
        $region36: #{tpu_custom_call.1} parent=31 // pred_fallthru
          _
      $region32: #{tpu_custom_call.1} parent=5 // pred_fallthru
        _
      %p266 = scmp.le.s32.totalorder 1, %s16
      %p267 = scmp.lt.s32.totalorder %s16, 5
      %p268 = pnand %p266, %p267
      %p269 = pneg %p268
      // Predicated region
      $region37: #{tpu_custom_call.1} parent=5 // pred_check
        _
      $region38: #{tpu_custom_call.1} parent=5 // pred_check_branch
        %271 = sbr.rel (%p268) target = $region40
      $region39: #{tpu_custom_call.1} parent=5 // pred_region
        %s272 = ssub.s32 %s16, 1
        // Predicated region
        $region41: #{tpu_custom_call.1} parent=39 // pred_check
          %p273 = pneg %p108
        $region42: #{tpu_custom_call.1} parent=39 // pred_check_branch
          %275 = sbr.rel (%p273) target = $region44
        $region43: #{tpu_custom_call.1} parent=39 // pred_region
          %276 = dma.done [#allocation4], 128
        $region44: #{tpu_custom_call.1} parent=39 // pred_fallthru
          _
        %p277 = scmp.lt.s32.totalorder %s26, 3
        %s278 = scalar_select %p277, %s26, 3
        %p279 = scmp.lt.s32.totalorder %s25, 0
        %s280 = scalar_select %p279, %s25, 0
        %s281 = sadd.s32 %s280, %s278
        %s282 = smul.addr %s281, 8
        %s283 = scalar_lea.vmem %s0, %s282
        %p284 = pneg %p56
        %p285 = pneg %p53
        %p286 = scmp.lt.s32.totalorder %s25, 0
        %s287 = scalar_select %p286, %s25, 0
        %s288 = smul.addr %s287, 8
        %s289 = scalar_lea.vmem %s1, %s288
        %p290 = pneg %p82
        %p291 = pneg %p79
        %p292 = pneg %p108
        %p293 = pneg %p105
        %p294 = scmp.lt.s32.totalorder %s25, 0
        %s295 = scalar_select %p294, %s25, 0
        %s296 = smul.addr %s295, 8
        %s297 = scalar_lea.vmem %s3, %s296
        %p298 = pneg %p134
        %p299 = pneg %p131
        %p300 = pneg %p155
        %p301 = pneg %p152
        %p302 = pneg %p181
        %p303 = pneg %p178
        %p304 = pneg %p207
        %p305 = pneg %p204
        %p306 = scmp.lt.s32.totalorder %s26, 3
        %s307 = scalar_select %p306, %s26, 3
        %p308 = scmp.lt.s32.totalorder %s25, 0
        %s309 = scalar_select %p308, %s25, 0
        %s310 = sadd.s32 %s309, %s307
        %s311 = smul.addr %s310, 8
        %s312 = scalar_lea.vmem %s0, %s311
        %p313 = scmp.lt.s32.totalorder %s25, 0
        %s314 = scalar_select %p313, %s25, 0
        %s315 = smul.addr %s314, 8
        %s316 = scalar_lea.vmem %s1, %s315
        %p317 = scmp.lt.s32.totalorder %s25, 0
        %s318 = scalar_select %p317, %s25, 0
        %s319 = smul.addr %s318, 8
        %s320 = scalar_lea.vmem %s3, %s319
        %v321 = vld [vmem:[%s312] sm:$0xff]
        %s322 = smul.u32 %s26, 8
        %s323 = scalar_lea.vmem %s316, %s322
        %v324 = vld [vmem:[%s323] sm:$0xff]
        %326 = vset.pattern.permute.xlu0 0
        %327 = vperm.xlu0 %326, %v324
        %v328 = vpop.permute.xlu0 %327
        %v330 = vmul.f32 %v321, %v328
        %p331 = scmp.eq.s32.totalorder %s26, 0
        // Predicated region
        $region45: #{tpu_custom_call.1} parent=39 // pred_check
          %p332 = pneg %p331
        $region46: #{tpu_custom_call.1} parent=39 // pred_check_branch
          %334 = sbr.rel (%p332) target = $region48
        $region47: #{tpu_custom_call.1} parent=39 // pred_region
          %v335 = vld [vmem:[#allocation3] sm:$0xff]
          %v336 = vadd.f32 %v330, %v335
          %v337 = vld [vmem:[%s320] sm:$0xff]
          %v338 = vadd.f32 %v336, %v337
          %339 = vst [vmem:[#allocation2] sm:$0xff] %v338
        $region48: #{tpu_custom_call.1} parent=39 // pred_fallthru
          _
        %p340 = scmp.ne.s32.totalorder %s26, 0
        // Predicated region
        $region49: #{tpu_custom_call.1} parent=39 // pred_check
          %p341 = pneg %p340
        $region50: #{tpu_custom_call.1} parent=39 // pred_check_branch
          %343 = sbr.rel (%p341) target = $region52
        $region51: #{tpu_custom_call.1} parent=39 // pred_region
          %v344 = vld [vmem:[#allocation2] sm:$0xff]
          %v345 = vadd.f32 %v344, %v330
          %346 = vst [vmem:[#allocation2] sm:$0xff] %v345
        $region52: #{tpu_custom_call.1} parent=39 // pred_fallthru
          _
        %p347 = scmp.eq.s32.totalorder %s26, 3
        // Predicated region
        $region53: #{tpu_custom_call.1} parent=39 // pred_check
          %p348 = pneg %p347
        $region54: #{tpu_custom_call.1} parent=39 // pred_check_branch
          %350 = sbr.rel (%p348) target = $region56
        $region55: #{tpu_custom_call.1} parent=39 // pred_region
          %v351 = vld [vmem:[#allocation2] sm:$0xff]
          %v352 = vmul.f32 %v351, %v351
          %353 = vadd.xlane.f32.xlu0 %v352
          %v354 = vpop.xlane.xlu0 %353
          %v355 = vrcp.pop 128.0
          %v356 = vmul.f32 %v354, %v355
          %v357 = vadd.f32 %v356, 1e-06
          %v358 = vrsqrt.pop %v357
          %v359 = vld [vmem:[%s4] sm:$0x1]
          %v361 = vlaneseq
          %v362 = vshrl.u32 %v361, 7
          %v363 = vsub.s32 0, %v362
          %v364 = vrot.slane %v359, %v363
          %v366 = vmul.f32 %v358, %v364
          %v367 = vmul.f32 %v351, %v366
          %368 = vst [vmem:[#allocation6] sm:$0xff] %v367
          %369 = vst [vmem:[#allocation7] sm:$0xff] %v351
        $region56: #{tpu_custom_call.1} parent=39 // pred_fallthru
          _
        // Predicated region
        $region57: #{tpu_custom_call.1} parent=39 // pred_check
          %p370 = pneg %p178
        $region58: #{tpu_custom_call.1} parent=39 // pred_check_branch
          %372 = sbr.rel (%p370) target = $region60
        $region59: #{tpu_custom_call.1} parent=39 // pred_region
          %s374 = ssub.s32 128, 128
          %375 = vsyncadd [#allocation5], %s374
          %s376 = smul.addr %s25, 128
          %s377 = scalar_lea.hbm %s5, %s376
          %s379 = sshll.u32 [#allocation6], 4
          %s380 = int_to_ptr.vmem [resolvable:$true] %s379
          %382 = dma.vmem_to_hbm [thread:$0]  %s380, 128, %s377, [#allocation5]
        $region60: #{tpu_custom_call.1} parent=39 // pred_fallthru
          _
        // Predicated region
        $region61: #{tpu_custom_call.1} parent=39 // pred_check
          %p383 = pneg %p204
        $region62: #{tpu_custom_call.1} parent=39 // pred_check_branch
          %385 = sbr.rel (%p383) target = $region64
        $region63: #{tpu_custom_call.1} parent=39 // pred_region
          %s387 = ssub.s32 128, 128
          %388 = vsyncadd [#allocation8], %s387
          %s389 = smul.addr %s25, 128
          %s390 = scalar_lea.hbm %s6, %s389
          %s392 = sshll.u32 [#allocation7], 4
          %s393 = int_to_ptr.vmem [resolvable:$true] %s392
          %395 = dma.vmem_to_hbm [thread:$0]  %s393, 128, %s390, [#allocation8]
        $region64: #{tpu_custom_call.1} parent=39 // pred_fallthru
          _
        // Predicated region
        $region65: #{tpu_custom_call.1} parent=39 // pred_check
          %p396 = pneg %p178
        $region66: #{tpu_custom_call.1} parent=39 // pred_check_branch
          %398 = sbr.rel (%p396) target = $region68
        $region67: #{tpu_custom_call.1} parent=39 // pred_region
          %399 = dma.done [#allocation5], 128
        $region68: #{tpu_custom_call.1} parent=39 // pred_fallthru
          _
        // Predicated region
        $region69: #{tpu_custom_call.1} parent=39 // pred_check
          %p400 = pneg %p204
        $region70: #{tpu_custom_call.1} parent=39 // pred_check_branch
          %402 = sbr.rel (%p400) target = $region72
        $region71: #{tpu_custom_call.1} parent=39 // pred_region
          %403 = dma.done [#allocation8], 128
        $region72: #{tpu_custom_call.1} parent=39 // pred_fallthru
          _
      $region40: #{tpu_custom_call.1} parent=5 // pred_fallthru
        _
      %p404 = scmp.le.s32.totalorder 2, %s16
      // Predicated region
      $region73: #{tpu_custom_call.1} parent=5 // pred_check
        %p405 = pneg %p404
      $region74: #{tpu_custom_call.1} parent=5 // pred_check_branch
        %407 = sbr.rel (%p405) target = $region76
      $region75: #{tpu_custom_call.1} parent=5 // pred_region
        %s408 = ssub.s32 %s16, 2
      $region76: #{tpu_custom_call.1} parent=5 // pred_fallthru
        _
    $region6: #{tpu_custom_call.1} parent=1 // loop_footer
      %s20 = sadd.s32 1, %s16
    $region7: #{tpu_custom_call.1} parent=1 // loop_footer_branch
      %15 = sbr.rel target = $region3
    $region8: #{tpu_custom_call.1} parent=1 // loop_exit
      _
    %409 = vsyncpa [#allocation4], 1
    %s410 = scalar_lea.sflag [#allocation4], 1
    %411 = vsyncpa %s410, 1
    %412 = vsyncpa [#allocation5], 1
    %s413 = scalar_lea.sflag [#allocation5], 1
    %414 = vsyncpa %s413, 1
    %415 = vsyncpa [#allocation8], 1

</llo_original>
